<compile_context>
chip_gen: v5e
topology: v5e:2x2
jax: 0.10.0
libtpu: 0.0.40
codegen_flags: <defaults>
</compile_context>

<pallas_src>
import functools
from typing import Optional

import jax
import jax.numpy as jnp
from jax.experimental import pallas as pl
from jax.experimental.pallas import tpu as pltpu


_LANES = 128
_SUBLANES = 8
_MIN_TILES = 8            # target minimum grid steps when there is enough work


def _detect_tpu():
    """Generation-aware tile budget / VMEM limit / bf16-VPU capability."""
    kind = ""
    try:
        kind = (getattr(jax.devices()[0], "device_kind", "") or "").lower()
    except Exception:
        pass
    vmem_bytes = None
    try:
        info = pltpu.get_tpu_info()
        for attr in ("vmem_capacity_bytes", "vmem_size_bytes", "vmem_bytes"):
            val = getattr(info, attr, None)
            if val:
                vmem_bytes = int(val)
                break
    except Exception:
        pass
    if vmem_bytes is None:
        # v5*/v6* have 128 MiB VMEM per core; assume 64 MiB (v7x-like) otherwise.
        vmem_bytes = (128 << 20) if ("v5" in kind or "v6" in kind) else (64 << 20)
    is_v5e = ("v5 lite" in kind) or ("v5e" in kind) or ("v5litepod" in kind)
    if vmem_bytes >= (96 << 20):          # v5e / v6e class: plenty of VMEM
        tile_bytes, vmem_limit = 8 << 20, 96 << 20
    else:                                  # v7x class (or unknown): conservative
        tile_bytes, vmem_limit = 5 << 20, 56 << 20
    return is_v5e, tile_bytes, vmem_limit


def _rowsum_packed_kernel(x_ref, y_ref, out_ref, *, rows_per_vec, feat,
                          compute_dtype, use_mxu):
    """Fused compute_components + identity transforms + 'sum' reduction.

    Inputs are lane-packed: each 128-lane row holds `rows_per_vec` consecutive
    batch rows of `feat` features (feat * rows_per_vec == 128).
    out_ref[p, r] = sum_j relu(x[p*rows_per_vec + r, j] - y[p*rows_per_vec + r, j])
    """
    x = x_ref[...].astype(compute_dtype)       # no-op when dtypes already match
    y = y_ref[...].astype(compute_dtype)
    diff = jnp.maximum(x - y, 0.0)             # VPU elementwise (asymmetric part)
    if use_mxu:
        # bf16 path: per-segment sums on the otherwise-idle MXU (native bf16
        # operands, exact f32 accumulation).  Selector built from 2-D iotas,
        # avoiding integer division (feat is a power of two anyway).
        lane = jax.lax.broadcasted_iota(jnp.int32, (_LANES, rows_per_vec), 0)
        seg = jax.lax.broadcasted_iota(jnp.int32, (_LANES, rows_per_vec), 1)
        sel = ((lane >= seg * feat) & (lane < (seg + 1) * feat)).astype(compute_dtype)
        res = jnp.dot(diff, sel, preferred_element_type=jnp.float32)
    else:
        # f32 path: static lane-segment reductions (XLU); exact and hidden
        # under HBM slack for 4-byte inputs.
        segs = [
            jnp.sum(diff[:, r * feat:(r + 1) * feat], axis=-1, keepdims=True)
            for r in range(rows_per_vec)
        ]
        res = jnp.concatenate(segs, axis=-1)
    out_ref[...] = res.astype(out_ref.dtype)


def _rowsum_wide_kernel(x_ref, y_ref, out_ref, *, compute_dtype):
    """Same computation for input_size >= 128 (lanes already dense)."""
    x = x_ref[...].astype(compute_dtype)
    y = y_ref[...].astype(compute_dtype)
    diff = jnp.maximum(x - y, 0.0)
    out_ref[...] = jnp.sum(diff.astype(jnp.float32), axis=-1,
                           keepdims=True).astype(out_ref.dtype)


class QuasimetricPallas:
    """JAX/Pallas analogue of QuasimetricBase with a concrete compute_components
    (per-group relu sums), transforms=() and reduction='sum'."""

    def __init__(self, input_size: int, num_components: int,
                 discount: Optional[float] = None,
                 max_tile_bytes: Optional[int] = None) -> None:
        assert input_size % num_components == 0
        self.input_size = input_size
        self.num_components = num_components
        self.discount = discount
        self.guaranteed_quasimetric = True

        is_v5e, tile_bytes, vmem_limit = _detect_tpu()
        self._bf16_vpu_ok = not is_v5e          # v5e has no bf16 VALU
        self._tile_bytes = max_tile_bytes if max_tile_bytes is not None else tile_bytes
        self._vmem_limit = vmem_limit

        # Group-membership matrix [D, K] documents the component structure and
        # is used by the pure-JAX reference.  With identity transforms and
        # 'sum' reduction, sum_k (relu(x-y) @ G)_k == sum_j relu(x_j - y_j), so
        # the kernel never materializes the components.
        group_size = input_size // num_components
        gid = jnp.arange(input_size) // group_size
        self.group_matrix = (gid[:, None] ==
                             jnp.arange(num_components)[None, :]).astype(jnp.float32)

    # ----------------------------------------------------------------------
    def __call__(self, x: jnp.ndarray, y: jnp.ndarray) -> jnp.ndarray:
        assert x.shape[-1] == y.shape[-1] == self.input_size
        assert x.shape == y.shape
        batch_shape = x.shape[:-1]
        D = self.input_size
        x2 = x.reshape(-1, D)
        y2 = y.reshape(-1, D)
        if D < _LANES and _LANES % D == 0:
            out = self._forward_packed(x2, y2)
        else:
            out = self._forward_wide(x2, y2)
        return out.reshape(batch_shape)

    # ----------------------------------------------------------------------
    def _compute_dtype(self, dt):
        if self._bf16_vpu_ok and dt == jnp.bfloat16:
            return jnp.bfloat16
        return jnp.float32

    def _block_rows(self, total_rows: int, lanes_padded: int) -> int:
        # VMEM accounting: lane-padded, post-f32-upcast footprint per row.
        row_bytes = lanes_padded * 4
        budget_rows = max(_SUBLANES, self._tile_bytes // row_bytes)
        # Keep the grid multi-step when there is enough work so BlockSpec
        # double-buffering overlaps DMA with compute and the ("parallel",)
        # axis can shard over both v7x TensorCores.
        if total_rows > _SUBLANES * _MIN_TILES:
            budget_rows = min(budget_rows, pl.cdiv(total_rows, _MIN_TILES))
        if total_rows <= budget_rows:
            return total_rows               # single full-extent block (legal)
        budget_rows -= budget_rows % _SUBLANES
        return max(_SUBLANES, budget_rows)

    # ----------------------------------------------------------------------
    def _forward_packed(self, x2: jnp.ndarray, y2: jnp.ndarray) -> jnp.ndarray:
        B, D = x2.shape
        R = _LANES // D                      # batch rows packed per 128-lane row
        pad = (-B) % R
        if pad:
            # At most R-1 rows so the free row-major reshape to 128 lanes is
            # valid (relu(0-0)=0 rows are sliced off below).
            x2 = jnp.pad(x2, ((0, pad), (0, 0)))
            y2 = jnp.pad(y2, ((0, pad), (0, 0)))
        Bp = x2.shape[0] // R
        xp = x2.reshape(Bp, _LANES)          # contiguous reshape: no data movement
        yp = y2.reshape(Bp, _LANES)

        block_r = self._block_rows(Bp, _LANES)
        num_tiles = pl.cdiv(Bp, block_r)     # last block may be partial: OOB
                                             # reads only feed rows whose
                                             # writes Pallas masks out.
        cdt = self._compute_dtype(xp.dtype)
        kernel = functools.partial(_rowsum_packed_kernel, rows_per_vec=R, feat=D,
                                   compute_dtype=cdt,
                                   use_mxu=(cdt == jnp.bfloat16))
        out = pl.pallas_call(
            kernel,
            out_shape=jax.ShapeDtypeStruct((Bp, R), jnp.float32),
            grid_spec=pltpu.PrefetchScalarGridSpec(
                num_scalar_prefetch=0,
                grid=(num_tiles,),
                in_specs=[
                    pl.BlockSpec((block_r, _LANES), lambda i: (i, 0)),
                    pl.BlockSpec((block_r, _LANES), lambda i: (i, 0)),
                ],
                out_specs=pl.BlockSpec((block_r, R), lambda i: (i, 0)),
            ),
            compiler_params=pltpu.CompilerParams(
                dimension_semantics=("parallel",),
                vmem_limit_bytes=self._vmem_limit,
            ),
        )(xp, yp)
        # out[p, r] corresponds to batch row p*R + r; row-major flatten
        # restores batch order; [:B] drops the (zero) R-pad results.
        return out.reshape(-1)[:B] if pad else out.reshape(B)

    def _forward_wide(self, x2: jnp.ndarray, y2: jnp.ndarray) -> jnp.ndarray:
        B, D = x2.shape
        lanes_padded = pl.cdiv(D, _LANES) * _LANES
        block_b = self._block_rows(B, lanes_padded)
        num_tiles = pl.cdiv(B, block_b)      # partial last block, no jnp.pad
        cdt = self._compute_dtype(x2.dtype)

        out = pl.pallas_call(
            functools.partial(_rowsum_wide_kernel, compute_dtype=cdt),
            out_shape=jax.ShapeDtypeStruct((B, 1), jnp.float32),
            grid_spec=pltpu.PrefetchScalarGridSpec(
                num_scalar_prefetch=0,
                grid=(num_tiles,),
                in_specs=[
                    pl.BlockSpec((block_b, D), lambda i: (i, 0)),
                    pl.BlockSpec((block_b, D), lambda i: (i, 0)),
                ],
                out_specs=pl.BlockSpec((block_b, 1), lambda i: (i, 0)),
            ),
            compiler_params=pltpu.CompilerParams(
                dimension_semantics=("parallel",),
                vmem_limit_bytes=self._vmem_limit,
            ),
        )(x2, y2)
        return out[:, 0]


def _reference_forward(x, y, group_matrix):
    """Pure-JAX reference mirroring the PyTorch structure:
    compute_components (per-group relu sums) -> identity transforms -> 'sum'."""
    xf = x.astype(jnp.float32)
    yf = y.astype(jnp.float32)
    diff = jnp.maximum(xf - yf, 0.0)
    comps = jnp.einsum("...d,dk->...k", diff, group_matrix,
                       precision=jax.lax.Precision.HIGHEST)   # [..., K]
    return comps.sum(-1)


if __name__ == "__main__":
    key = jax.random.PRNGKey(0)
    k = jax.random.split(key, 8)

    # --- test 1: small D (packed lane path), f32, tiny batch ---------------
    B, D, K = 8, 32, 4
    x = jax.random.normal(k[0], (B, D), dtype=jnp.float32)
    y = jax.random.normal(k[1], (B, D), dtype=jnp.float32)
    qm = QuasimetricPallas(D, K)
    out = jax.block_until_ready(qm(x, y))
    ref = _reference_forward(x, y, qm.group_matrix)
    assert out.shape == (B,)
    assert jnp.allclose(out, ref, atol=1e-5, rtol=1e-5), "test1 mismatch"

    # --- test 2: wide D (lane-dense path), bf16 kept native in-kernel ------
    B2, D2, K2 = 16, 256, 8
    xb = jax.random.normal(k[2], (B2, D2), dtype=jnp.bfloat16)
    yb = jax.random.normal(k[3], (B2, D2), dtype=jnp.bfloat16)
    qm_wide = QuasimetricPallas(D2, K2)
    out2 = jax.block_until_ready(qm_wide(xb, yb))
    ref2 = _reference_forward(xb, yb, qm_wide.group_matrix)
    assert out2.shape == (B2,)
    assert jnp.allclose(out2, ref2, atol=5e-2, rtol=1e-2), "test2 mismatch"

    # --- test 3: packed path, B not multiple of R, multi-tile grid with a
    # partial last block (tiny tile budget forces several grid steps) -------
    B3 = 203
    x3 = jax.random.normal(k[4], (B3, D), dtype=jnp.float32)
    y3 = jax.random.normal(k[5], (B3, D), dtype=jnp.float32)
    qm_tiled = QuasimetricPallas(D, K, max_tile_bytes=8 * 1024)
    out3 = jax.block_until_ready(qm_tiled(x3, y3))
    ref3 = _reference_forward(x3, y3, qm_tiled.group_matrix)
    assert out3.shape == (B3,)
    assert jnp.allclose(out3, ref3, atol=1e-5, rtol=1e-5), "test3 mismatch"

    # --- test 4: packed path with bf16 (MXU segment-sum on v6e/v7x,
    # f32 VPU path on v5e), odd batch ---------------------------------------
    B4, D4, K4 = 203, 16, 4
    x4 = jax.random.normal(k[6], (B4, D4), dtype=jnp.bfloat16)
    y4 = jax.random.normal(k[7], (B4, D4), dtype=jnp.bfloat16)
    qm_bf16 = QuasimetricPallas(D4, K4)
    out4 = jax.block_until_ready(qm_bf16(x4, y4))
    ref4 = _reference_forward(x4, y4, qm_bf16.group_matrix)
    assert out4.shape == (B4,)
    assert jnp.allclose(out4, ref4, atol=2e-2, rtol=2e-2), "test4 mismatch"

    print("KERNEL_OK")
</pallas_src>

<mosaic_0001>
module attributes {stable_mosaic.version = 11 : i64} {
  func.func @_rowsum_packed_kernel(%arg0: i32, %arg1: memref<2x128xf32, #tpu.memory_space<vmem>>, %arg2: memref<2x128xf32, #tpu.memory_space<vmem>>, %arg3: memref<2x4xf32, #tpu.memory_space<vmem>>) attributes {dimension_semantics = [#tpu.dimension_semantics<parallel>], iteration_bounds = array<i64: 1>, scalar_prefetch = 0 : i64, scratch_operands = 0 : i64, tpu.core_type = #tpu.core_type<tc>, window_params = [{transform_indices = @transform_0, window_bounds = array<i64: 2, 128>}, {transform_indices = @transform_1, window_bounds = array<i64: 2, 128>}, {transform_indices = @transform_2, window_bounds = array<i64: 2, 4>}]} {
    %c0 = arith.constant 0 : index
    %c0_0 = arith.constant 0 : index
    %0 = vector.load %arg1[%c0, %c0_0] : memref<2x128xf32, #tpu.memory_space<vmem>>, vector<2x128xf32>
    %c0_1 = arith.constant 0 : index
    %c0_2 = arith.constant 0 : index
    %1 = vector.load %arg2[%c0_1, %c0_2] : memref<2x128xf32, #tpu.memory_space<vmem>>, vector<2x128xf32>
    %2 = arith.subf %0, %1 : vector<2x128xf32>
    %cst = arith.constant 0.000000e+00 : f32
    %3 = vector.broadcast %cst : f32 to vector<2x128xf32>
    %4 = arith.maximumf %2, %3 : vector<2x128xf32>
    %5 = vector.extract_strided_slice %4 {offsets = [0, 0], sizes = [2, 32], strides = [1, 1]} : vector<2x128xf32> to vector<2x32xf32>
    %cst_3 = arith.constant dense<0.000000e+00> : vector<2xf32>
    %6 = vector.multi_reduction <add>, %5, %cst_3 [1] : vector<2x32xf32> to vector<2xf32>
    %7 = vector.shape_cast %6 : vector<2xf32> to vector<2x1xf32>
    %8 = vector.extract_strided_slice %4 {offsets = [0, 32], sizes = [2, 32], strides = [1, 1]} : vector<2x128xf32> to vector<2x32xf32>
    %cst_4 = arith.constant dense<0.000000e+00> : vector<2xf32>
    %9 = vector.multi_reduction <add>, %8, %cst_4 [1] : vector<2x32xf32> to vector<2xf32>
    %10 = vector.shape_cast %9 : vector<2xf32> to vector<2x1xf32>
    %11 = vector.extract_strided_slice %4 {offsets = [0, 64], sizes = [2, 32], strides = [1, 1]} : vector<2x128xf32> to vector<2x32xf32>
    %cst_5 = arith.constant dense<0.000000e+00> : vector<2xf32>
    %12 = vector.multi_reduction <add>, %11, %cst_5 [1] : vector<2x32xf32> to vector<2xf32>
    %13 = vector.shape_cast %12 : vector<2xf32> to vector<2x1xf32>
    %14 = vector.extract_strided_slice %4 {offsets = [0, 96], sizes = [2, 32], strides = [1, 1]} : vector<2x128xf32> to vector<2x32xf32>
    %cst_6 = arith.constant dense<0.000000e+00> : vector<2xf32>
    %15 = vector.multi_reduction <add>, %14, %cst_6 [1] : vector<2x32xf32> to vector<2xf32>
    %16 = vector.shape_cast %15 : vector<2xf32> to vector<2x1xf32>
    %17 = tpu.concatenate %7, %10, %13, %16 in 1 : vector<2x1xf32>, vector<2x1xf32>, vector<2x1xf32>, vector<2x1xf32> -> vector<2x4xf32>
    %c0_7 = arith.constant 0 : index
    %c0_8 = arith.constant 0 : index
    %18 = vector.load %arg3[%c0_7, %c0_8] : memref<2x4xf32, #tpu.memory_space<vmem>>, vector<2x4xf32>
    tpu.vector_store %arg3[%c0_7, %c0_8], %17 {strides = array<i32>} : memref<2x4xf32, #tpu.memory_space<vmem>>, vector<2x4xf32>,
    return
  }
  func.func @transform_0(%arg0: i32) -> (i32, i32) {
    %c0_i32 = arith.constant 0 : i32
    %c0_i32_0 = arith.constant 0 : i32
    return %arg0, %c0_i32 : i32, i32
  }
  func.func @transform_1(%arg0: i32) -> (i32, i32) {
    %c0_i32 = arith.constant 0 : i32
    %c0_i32_0 = arith.constant 0 : i32
    return %arg0, %c0_i32 : i32, i32
  }
  func.func @transform_2(%arg0: i32) -> (i32, i32) {
    %c0_i32 = arith.constant 0 : i32
    %c0_i32_0 = arith.constant 0 : i32
    return %arg0, %c0_i32 : i32, i32
  }
}

</mosaic_0001>

<llo_original>
// kernel: tpu_custom_call.1
$region0: #{tpu_custom_call.1}
  #allocation0 [shape = 'u32[]', space=smem, size = 0x4, offset = 0x4, fixed_abs, tag = 'smem constant byte address 0x4 - core index']
  #allocation1 [shape = 'u32[72,128]{1,0:T(1,128)}', space=vmem, size = 0x9000, scoped, tag = 'internal scratch']
  %s0 = inlined_call_operand.hbm [shape: f32[2,128], index: 0, kind: input, shape index: {}]
  %s1 = inlined_call_operand.hbm [shape: f32[2,128], index: 1, kind: input, shape index: {}]
  %s2 = inlined_call_operand.hbm [shape: f32[2,4], index: 2, kind: output, shape index: {}]
  %s3 = sld [smem:[#allocation0]]
  $region26: #{tpu_custom_call.1} parent=0
    _
  %s5 = ssub.s32 1, %s3
  %s6 = scalar_select 0, %s5, %s3
  $region1: #{tpu_custom_call.1} parent=0
    #allocation2 [shape = 'u8[1024]{0}', space=vmem, size = 0x400, scoped, tag = 'input window, operand 0, single buffered']
    #allocation3 [shape = 's32[1]{0}', space=sflag, size = 0x4, scoped, tag = 'scoped memory for tpu_custom_call.1']
    #allocation4 [shape = 's32[1]{0}', space=sflag, size = 0x4, scoped, tag = 'scoped memory for tpu_custom_call.1']
    #allocation5 [shape = 'u8[1024]{0}', space=vmem, size = 0x400, scoped, tag = 'input window, operand 1, single buffered']
    #allocation6 [shape = 's32[1]{0}', space=sflag, size = 0x4, scoped, tag = 'scoped memory for tpu_custom_call.1']
    #allocation7 [shape = 'u8[1024]{0}', space=vmem, size = 0x400, scoped, tag = 'output window, operand 0, single buffered']
    %7 = vsyncpa [#allocation3], 0
    %8 = vsyncpa [#allocation6], 0
    %9 = vsyncpa [#allocation4], 0
    // Predicated region
    $region2: #{tpu_custom_call.1} parent=1 // pred_check
      _
    $region3: #{tpu_custom_call.1} parent=1 // pred_check_branch
      %11 = sbr.rel (0) target = $region5
    $region4: #{tpu_custom_call.1} parent=1 // pred_region
      %13 = vsyncadd [#allocation3], 0
      %s15 = sshll.u32 %s0, 4
      %s16 = int_to_ptr.hbm [resolvable:$true] %s15
      %s17 = sshll.u32 [#allocation2], 4
      %s18 = int_to_ptr.vmem [resolvable:$true] %s17
      %20 = dma.hbm_to_vmem [thread:$0]  %s16, 32, %s18, [#allocation3]
    $region5: #{tpu_custom_call.1} parent=1 // pred_fallthru
      _
    // Predicated region
    $region6: #{tpu_custom_call.1} parent=1 // pred_check
      _
    $region7: #{tpu_custom_call.1} parent=1 // pred_check_branch
      %22 = sbr.rel (0) target = $region9
    $region8: #{tpu_custom_call.1} parent=1 // pred_region
      %24 = vsyncadd [#allocation6], 0
      %s26 = sshll.u32 %s1, 4
      %s27 = int_to_ptr.hbm [resolvable:$true] %s26
      %s28 = sshll.u32 [#allocation5], 4
      %s29 = int_to_ptr.vmem [resolvable:$true] %s28
      %31 = dma.hbm_to_vmem [thread:$0]  %s27, 32, %s29, [#allocation6]
    $region9: #{tpu_custom_call.1} parent=1 // pred_fallthru
      _
    // Predicated region
    $region10: #{tpu_custom_call.1} parent=1 // pred_check
      _
    $region11: #{tpu_custom_call.1} parent=1 // pred_check_branch
      %33 = sbr.rel (0) target = $region13
    $region12: #{tpu_custom_call.1} parent=1 // pred_region
      %35 = dma.done [#allocation3], 32
    $region13: #{tpu_custom_call.1} parent=1 // pred_fallthru
      _
    // Predicated region
    $region14: #{tpu_custom_call.1} parent=1 // pred_check
      _
    $region15: #{tpu_custom_call.1} parent=1 // pred_check_branch
      %37 = sbr.rel (0) target = $region17
    $region16: #{tpu_custom_call.1} parent=1 // pred_region
      %39 = dma.done [#allocation6], 32
    $region17: #{tpu_custom_call.1} parent=1 // pred_fallthru
      _
    %v40 = vld [vmem:[#allocation2] sm:$0x3]
    %v41 = vld [vmem:[#allocation5] sm:$0x3]
    %v42 = vsub.f32 %v40, %v41
    %v43 = vmax.f32 %v42, 0.0
    %vm44 = vcmask 254976
    %v45 = vsel %vm44, %v43, 0.0
    %46 = vadd.xlane.f32.xlu0 %v45
    %v47 = vpop.xlane.xlu0 %46
    %49 = vrot.lane.b32.xlu0 %v43, 96
    %v50 = vpop.permute.xlu0 %49
    %v52 = vsel %vm44, %v50, 0.0
    %53 = vadd.xlane.f32.xlu0 %v52
    %v54 = vpop.xlane.xlu0 %53
    %55 = vrot.lane.b32.xlu0 %v43, 64
    %v56 = vpop.permute.xlu0 %55
    %v58 = vsel %vm44, %v56, 0.0
    %59 = vadd.xlane.f32.xlu0 %v58
    %v60 = vpop.xlane.xlu0 %59
    %61 = vrot.lane.b32.xlu0 %v43, 32
    %v62 = vpop.permute.xlu0 %61
    %v64 = vsel %vm44, %v62, 0.0
    %65 = vadd.xlane.f32.xlu0 %v64
    %v66 = vpop.xlane.xlu0 %65
    %vm67 = vcmask 7168
    %v68 = vsel %vm67, %v47, %v54
    %vm69 = vcmask 15360
    %v70 = vsel %vm69, %v68, %v60
    %vm71 = vcmask 23552
    %v72 = vsel %vm71, %v70, %v66
    %vm73 = vcmask 25600
    %74 = vst.msk [vmem:[#allocation7] sm:$0x3] %vm73, %v72
    // Predicated region
    $region18: #{tpu_custom_call.1} parent=1 // pred_check
      _
    $region19: #{tpu_custom_call.1} parent=1 // pred_check_branch
      %76 = sbr.rel (0) target = $region21
    $region20: #{tpu_custom_call.1} parent=1 // pred_region
      %78 = vsyncadd [#allocation4], 0
      %s80 = sshll.u32 [#allocation7], 4
      %s81 = int_to_ptr.vmem [resolvable:$true] %s80
      %s82 = sshll.u32 %s2, 4
      %s83 = int_to_ptr.hbm [resolvable:$true] %s82
      %85 = dma.vmem_to_hbm [thread:$0]  %s81, 32, %s83, [#allocation4]
    $region21: #{tpu_custom_call.1} parent=1 // pred_fallthru
      _
    // Predicated region
    $region22: #{tpu_custom_call.1} parent=1 // pred_check
      _
    $region23: #{tpu_custom_call.1} parent=1 // pred_check_branch
      %87 = sbr.rel (0) target = $region25
    $region24: #{tpu_custom_call.1} parent=1 // pred_region
      %89 = dma.done [#allocation4], 32
    $region25: #{tpu_custom_call.1} parent=1 // pred_fallthru
      _
    %90 = vsyncpa [#allocation3], 1
    %91 = vsyncpa [#allocation6], 1
    %92 = vsyncpa [#allocation4], 1

</llo_original>
